<compile_context>
chip_gen: v7x
topology: tpu7x:2x2x1
jax: 0.10.0
libtpu: 0.0.40
codegen_flags: <defaults>
</compile_context>

<pallas_src>
import jax
import jax.numpy as jnp
from jax.experimental import pallas as pl
from jax.experimental.pallas import tpu as pltpu


def _round_up(x: int, m: int) -> int:
    return ((x + m - 1) // m) * m


# --------------------------------------------------------------------------
# Fast path: whole problem fits comfortably in VMEM -> single gridless call.
# --------------------------------------------------------------------------
def _mlp_small_kernel(x_ref, w_ref, b_ref, o_ref):
    y = jnp.dot(x_ref[...], w_ref[...], preferred_element_type=jnp.float32)
    o_ref[...] = jax.nn.sigmoid(y + b_ref[...]).astype(o_ref.dtype)


def _mlp_small(x, w, b):
    B, J = x.shape
    K = w.shape[1]
    bytes_accessed = (x.size * x.dtype.itemsize + w.size * w.dtype.itemsize
                      + b.size * 4 + B * K * 4)
    return pl.pallas_call(
        _mlp_small_kernel,
        out_shape=jax.ShapeDtypeStruct((B, K), jnp.float32),
        in_specs=[pl.BlockSpec(memory_space=pltpu.MemorySpace.VMEM)] * 3,
        out_specs=pl.BlockSpec(memory_space=pltpu.MemorySpace.VMEM),
        cost_estimate=pl.CostEstimate(
            flops=2 * B * J * K,
            transcendentals=B * K,
            bytes_accessed=bytes_accessed,
        ),
    )(x, w, b)


# --------------------------------------------------------------------------
# Tiled path: 3-axis grid (M, N, K-reduction) with f32 VMEM accumulator.
# --------------------------------------------------------------------------
def _mlp_tiled_kernel(x_ref, w_ref, b_ref, o_ref, acc_ref):
    k = pl.program_id(2)

    @pl.when(k == 0)
    def _():
        # Fold the bias into the accumulator init: no extra VPU add pass later.
        acc_ref[...] = jnp.broadcast_to(b_ref[...], acc_ref.shape)

    acc_ref[...] += jnp.dot(
        x_ref[...], w_ref[...], preferred_element_type=jnp.float32
    )

    @pl.when(k == pl.num_programs(2) - 1)
    def _():
        # sigmoid: exp goes to the EUP slot.
        o_ref[...] = jax.nn.sigmoid(acc_ref[...]).astype(o_ref.dtype)


def _choose_tiles(B, J, K, tm_cap, tn_cap, tk_cap):
    tm = min(_round_up(B, 8), tm_cap)
    # v6e/v7x MXU is 256x256: keep N/K tiles on a 256 granule when possible
    # (128 is fine on v5e and unavoidable for small dims).
    n_gran = 256 if K >= 256 else 128
    k_gran = 256 if J >= 256 else 128
    tn = min(_round_up(K, n_gran), tn_cap)
    tk = min(_round_up(J, k_gran), tk_cap)
    # v7x has 2 TensorCores: make sure the "parallel" (M, N) grid has >= 2
    # blocks so dimension_semantics can actually shard across them.
    if pl.cdiv(B, tm) * pl.cdiv(K, tn) == 1:
        if K >= 2 * n_gran:
            tn = _round_up(pl.cdiv(K, 2), n_gran)
        elif B >= 16:
            tm = _round_up(pl.cdiv(B, 2), 8)
    return tm, tn, tk


def _mlp_tiled(x, w, b, tm, tn, tk):
    B, Jp = x.shape          # x already padded (if needed) along J
    K = w.shape[1]
    itemsize = x.dtype.itemsize
    grid = (pl.cdiv(B, tm), pl.cdiv(K, tn), Jp // tk)

    return pl.pallas_call(
        _mlp_tiled_kernel,
        out_shape=jax.ShapeDtypeStruct((B, K), jnp.float32),
        grid_spec=pltpu.PrefetchScalarGridSpec(
            num_scalar_prefetch=0,
            grid=grid,
            in_specs=[
                pl.BlockSpec((tm, tk), lambda i, j, k: (i, k)),   # x tile (bf16)
                pl.BlockSpec((tk, tn), lambda i, j, k: (k, j)),   # W tile (bf16)
                pl.BlockSpec((1, tn), lambda i, j, k: (0, j)),    # bias tile (f32)
            ],
            out_specs=pl.BlockSpec((tm, tn), lambda i, j, k: (i, j)),
            scratch_shapes=[pltpu.VMEM((tm, tn), jnp.float32)],
        ),
        compiler_params=pltpu.CompilerParams(
            dimension_semantics=("parallel", "parallel", "arbitrary"),
            vmem_limit_bytes=48 * 1024 * 1024,
        ),
        cost_estimate=pl.CostEstimate(
            flops=2 * B * Jp * K,
            transcendentals=B * K,
            bytes_accessed=(B * Jp + Jp * K) * itemsize + K * 4 + B * K * 4,
        ),
    )(x, w, b)


# --------------------------------------------------------------------------
# Public wrapper: sigmoid(x @ W + b)  ==  MlP.forward
# --------------------------------------------------------------------------
def mlp_forward(x, w, b, *, compute_dtype=jnp.bfloat16, force_tiled=False,
                tm_cap=512, tn_cap=1024, tk_cap=1024,
                small_vmem_bytes=8 * 1024 * 1024):
    """x: [B, J] f32, w: [J, K] (= PyTorch l1.weight.T), b: [K].

    Returns [B, K] float32 = sigmoid(x @ w + b).
    """
    B, J = x.shape
    Jw, K = w.shape
    assert J == Jw, "x / W shape mismatch"
    b2 = jnp.asarray(b).reshape(1, K).astype(jnp.float32)

    # Feed the MXU bf16 (f32 accumulation inside the kernel keeps accuracy).
    xc = x.astype(compute_dtype)
    wc = w.astype(compute_dtype)

    itemsize = jnp.dtype(compute_dtype).itemsize
    footprint = (B * J + J * K) * itemsize + B * K * 4 + K * 4
    if not force_tiled and footprint <= small_vmem_bytes:
        return _mlp_small(xc, wc, b2)

    tm, tn, tk = _choose_tiles(B, J, K, tm_cap, tn_cap, tk_cap)
    # Only the reduction (J) edge needs exact zero padding; B / K ragged edges
    # are handled by the cdiv grid (masked edge blocks), so no full-array pad
    # copies of x / W are made when J already divides tk.
    Jp = _round_up(J, tk)
    if Jp != J:
        # TODO(synk): in a training loop, pre-pad/cast W and b once outside the
        # hot path; only x then needs this per-call J-edge pad.
        xc = jnp.pad(xc, ((0, 0), (0, Jp - J)))
        wc = jnp.pad(wc, ((0, Jp - J), (0, 0)))

    return _mlp_tiled(xc, wc, b2, tm, tn, tk)


if __name__ == "__main__":
    key = jax.random.PRNGKey(0)

    # Module semantics: self.l1 = nn.Linear(q.shape[0], q.shape[1])
    #   -> in_features = J (items), out_features = K (skills).
    # --- demo 1: small module-sized shapes (gridless fast path) ---
    B, J, K = 8, 16, 4
    k1, k2, k3, k4, k5, k6 = jax.random.split(key, 6)
    bound = 1.0 / (J ** 0.5)   # nn.Linear default init range
    x = jax.random.normal(k1, (B, J), dtype=jnp.float32)
    w = jax.random.uniform(k2, (J, K), minval=-bound, maxval=bound, dtype=jnp.float32)
    b = jax.random.uniform(k3, (K,), minval=-bound, maxval=bound, dtype=jnp.float32)

    out = mlp_forward(x, w, b)
    jax.block_until_ready(out)
    ref = jax.nn.sigmoid(x @ w + b[None, :])
    assert out.shape == (B, K)
    assert jnp.allclose(out, ref, atol=2e-2), "fast-path mismatch vs reference"

    # --- demo 2: exercise the tiled / pipelined path (bias-init, k-reduction,
    #             two parallel N blocks for the v7x 2-TC heuristic) ---
    B2, J2, K2 = 96, 1536, 512
    bound2 = 1.0 / (J2 ** 0.5)
    x2 = jax.random.normal(k4, (B2, J2), dtype=jnp.float32)
    w2 = jax.random.uniform(k5, (J2, K2), minval=-bound2, maxval=bound2, dtype=jnp.float32)
    b2 = jax.random.uniform(k6, (K2,), minval=-bound2, maxval=bound2, dtype=jnp.float32)

    out2 = mlp_forward(x2, w2, b2, force_tiled=True)
    jax.block_until_ready(out2)
    ref2 = jax.nn.sigmoid(x2 @ w2 + b2[None, :])
    assert out2.shape == (B2, K2)
    assert jnp.allclose(out2, ref2, atol=2e-2), "tiled-path mismatch vs reference"

    print("KERNEL_OK")
</pallas_src>

<mosaic_0001>
module attributes {stable_mosaic.version = 11 : i64} {
  func.func @_mlp_small_kernel(%arg0: memref<8x16xbf16, #tpu.memory_space<vmem>>, %arg1: memref<16x4xbf16, #tpu.memory_space<vmem>>, %arg2: memref<1x4xf32, #tpu.memory_space<vmem>>, %arg3: memref<8x4xf32, #tpu.memory_space<vmem>>) attributes {dimension_semantics = [], scalar_prefetch = 0 : i64, scratch_operands = 0 : i64, tpu.core_type = #tpu.core_type<tc>} {
    %c0 = arith.constant 0 : index
    %c0_0 = arith.constant 0 : index
    %0 = vector.load %arg0[%c0, %c0_0] : memref<8x16xbf16, #tpu.memory_space<vmem>>, vector<8x16xbf16>
    %c0_1 = arith.constant 0 : index
    %c0_2 = arith.constant 0 : index
    %1 = vector.load %arg1[%c0_1, %c0_2] : memref<16x4xbf16, #tpu.memory_space<vmem>>, vector<16x4xbf16>
    %cst = arith.constant dense<0.000000e+00> : vector<8x4xf32>
    %2 = tpu.matmul %0, %1, %cst {dimension_numbers = #tpu.dot_dimension_numbers<[1], [0], [0], [1], [0, 0, 1, 1], [], []>} : vector<8x16xbf16>, vector<16x4xbf16>, vector<8x4xf32> -> vector<8x4xf32>
    %c0_3 = arith.constant 0 : index
    %c0_4 = arith.constant 0 : index
    %3 = vector.load %arg2[%c0_3, %c0_4] : memref<1x4xf32, #tpu.memory_space<vmem>>, vector<1x4xf32>
    %4 = vector.broadcast %3 : vector<1x4xf32> to vector<8x4xf32>
    %5 = arith.addf %2, %4 : vector<8x4xf32>
    %6 = arith.negf %5 : vector<8x4xf32>
    %7 = math.exp %6 : vector<8x4xf32>
    %cst_5 = arith.constant 1.000000e+00 : f32
    %8 = vector.broadcast %cst_5 : f32 to vector<8x4xf32>
    %9 = arith.addf %8, %7 : vector<8x4xf32>
    %10 = arith.divf %8, %9 : vector<8x4xf32>
    %c0_6 = arith.constant 0 : index
    %c0_7 = arith.constant 0 : index
    %11 = vector.load %arg3[%c0_6, %c0_7] : memref<8x4xf32, #tpu.memory_space<vmem>>, vector<8x4xf32>
    tpu.vector_store %arg3[%c0_6, %c0_7], %10 {strides = array<i32>} : memref<8x4xf32, #tpu.memory_space<vmem>>, vector<8x4xf32>,
    return
  }
}

</mosaic_0001>

<llo_original>
// kernel: tpu_custom_call.1
$region0: #{tpu_custom_call.1}
  #allocation0 [shape = 'u32[]', space=smem, size = 0x4, offset = 0x4, fixed_abs, tag = 'smem constant byte address 0x4 - core index']
  #allocation1 [shape = 'u32[144,128]{1,0:T(1,128)}', space=vmem, size = 0x12000, scoped, tag = 'internal scratch']
  %s0 = inlined_call_operand.vmem [shape: bf16[8,16], index: 0, kind: input, shape index: {}]
  %s1 = inlined_call_operand.vmem [shape: bf16[16,4], index: 1, kind: input, shape index: {}]
  %s2 = inlined_call_operand.vmem [shape: f32[1,4], index: 2, kind: input, shape index: {}]
  %s3 = inlined_call_operand.vmem [shape: f32[8,4], index: 3, kind: output, shape index: {}]
  %s4 = sld [smem:[#allocation0]]
  $region22: #{tpu_custom_call.1} parent=0
    _
  %s6 = ssub.s32 1, %s4
  %s7 = scalar_select 0, %s6, %s4
  // Predicated region
  $region2: #{tpu_custom_call.1} parent=0 // pred_check
    _
  $region3: #{tpu_custom_call.1} parent=0 // pred_check_branch
    %9 = sbr.rel (0) target = $region5
  $region4: #{tpu_custom_call.1} parent=0 // pred_region
    _
  $region5: #{tpu_custom_call.1} parent=0 // pred_fallthru
    _
  // Predicated region
  $region6: #{tpu_custom_call.1} parent=0 // pred_check
    _
  $region7: #{tpu_custom_call.1} parent=0 // pred_check_branch
    %11 = sbr.rel (0) target = $region9
  $region8: #{tpu_custom_call.1} parent=0 // pred_region
    _
  $region9: #{tpu_custom_call.1} parent=0 // pred_fallthru
    _
  // Predicated region
  $region10: #{tpu_custom_call.1} parent=0 // pred_check
    _
  $region11: #{tpu_custom_call.1} parent=0 // pred_check_branch
    %13 = sbr.rel (0) target = $region13
  $region12: #{tpu_custom_call.1} parent=0 // pred_region
    _
  $region13: #{tpu_custom_call.1} parent=0 // pred_fallthru
    _
  %v15 = vld [vmem:[%s0] sm:$0xf]
  %v16 = vld [vmem:[%s1] sm:$0xf]
  %v17 = vld [vmem:[%s1 + $0x4] sm:$0xf]
  %v18 = vld [vmem:[%s2] sm:$0x1]
  %v20 = vlaneseq
  %v21 = vshrl.u32 %v20, 7
  %v22 = vsub.s32 0, %v21
  %v23 = vrot.slane %v18, %v22
  %v27 = vunpack.c.l.b16 %v16
  %v28 = vunpack.c.l.b16 %v17
  %v29 = vpack.c.b16 %v28, %v27
  %vm31 = vcmask 130048
  %v33 = vsel %vm31, %v15, 0
  %35 = vmatprep.subr.bf16.mxu0 0
  %36 = vmatpush1.bf16.msra.mxu0 %v29
  %37 = vmatprep.subr.bf16.mxu0 0
  %38 = vmatpush1.bf16.msra.mxu0 0
  %39 = vmatprep.subr.bf16.mxu0 0
  %40 = vmatpush1.bf16.msra.mxu0 0
  %41 = vmatprep.subr.bf16.mxu0 0
  %42 = vmatpush1.bf16.msra.mxu0 0
  %43 = vmatprep.subr.bf16.mxu0 0
  %44 = vmatpush1.bf16.msra.mxu0 0
  %45 = vmatprep.subr.bf16.mxu0 0
  %46 = vmatpush1.bf16.msra.mxu0 0
  %47 = vmatprep.subr.bf16.mxu0 0
  %48 = vmatpush1.bf16.msra.mxu0 0
  %49 = vmatprep.subr.bf16.mxu0 0
  %50 = vmatpush1.bf16.msra.mxu0 0
  %51 = vmatprep.subr.bf16.mxu0 0
  %52 = vmatpush1.bf16.msra.mxu0 0
  %53 = vmatprep.subr.bf16.mxu0 0
  %54 = vmatpush1.bf16.msra.mxu0 0
  %55 = vmatprep.subr.bf16.mxu0 0
  %56 = vmatpush1.bf16.msra.mxu0 0
  %57 = vmatprep.subr.bf16.mxu0 0
  %58 = vmatpush1.bf16.msra.mxu0 0
  %59 = vmatprep.subr.bf16.mxu0 0
  %60 = vmatpush1.bf16.msra.mxu0 0
  %61 = vmatprep.subr.bf16.mxu0 0
  %62 = vmatpush1.bf16.msra.mxu0 0
  %63 = vmatprep.subr.bf16.mxu0 0
  %64 = vmatpush1.bf16.msra.mxu0 0
  %65 = vmatprep.subr.bf16.mxu0 0
  %66 = vmatpush1.bf16.msra.mxu0 0
  %67 = vmatprep.mubr.bf16.mxu0 0
  %68 = vmatmul.mubr.bf16.gmra.mrb[0].mxu0 %v33
  %v69 = vpop.f32.mrb[0].mxu0
  %v70 = vadd.f32 %v23, %v69
  %v71 = vpop.f32.mrb[0].mxu0
  %v72 = vpop.f32.mrb[0].mxu0
  %v73 = vpop.f32.mrb[0].mxu0
  %74 = vdwg.mxu0
  %v75 = vxor.u32 %v70, 2147483648
  %v76 = vmul.f32 %v75, 1.442695
  %v77 = vpow.pop %v76
  %v78 = vadd.f32 %v77, 1.0
  %v79 = vrcp.pop %v78
  %v80 = vmul.f32 1.0, %v79
  %vm81 = vcmask 31744
  %82 = vst.msk [vmem:[%s3] sm:$0xff] %vm81, %v80
  // Predicated region
  $region14: #{tpu_custom_call.1} parent=0 // pred_check
    _
  $region15: #{tpu_custom_call.1} parent=0 // pred_check_branch
    %84 = sbr.rel (0) target = $region17
  $region16: #{tpu_custom_call.1} parent=0 // pred_region
    _
  $region17: #{tpu_custom_call.1} parent=0 // pred_fallthru
    _
  // Predicated region
  $region18: #{tpu_custom_call.1} parent=0 // pred_check
    _
  $region19: #{tpu_custom_call.1} parent=0 // pred_check_branch
    %86 = sbr.rel (0) target = $region21
  $region20: #{tpu_custom_call.1} parent=0 // pred_region
    _
  $region21: #{tpu_custom_call.1} parent=0 // pred_fallthru
    _

</llo_original>
